<compile_context>
chip_gen: v7x
topology: tpu7x:2x2x1
jax: 0.10.0
libtpu: 0.0.40
codegen_flags: <defaults>
</compile_context>

<pallas_src>
import functools

import jax
import jax.numpy as jnp
from jax import lax
from jax.experimental import pallas as pl
from jax.experimental.pallas import tpu as pltpu


def _round_up(x, m):
    return (x + m - 1) // m * m


def _output_layer_kernel(x_ref, uwT_ref, fwT_ref, y_ref,
                         m_scr, d_scr, y_scr, *,
                         block_b, block_l, l_valid, need_mask, approx_recip):
    # x_ref   : (block_b, block_l, D)   original dtype (cast to MXU dtype here)
    # uwT_ref : (D, block_c)            U.weight^T tile      (MXU dtype)
    # fwT_ref : (D, block_c)            final.weight^T tile  (MXU dtype)
    # y_ref   : (block_b, block_c)      f32, lane-dense
    # m_scr/d_scr/y_scr : (block_b, block_c) f32 online-softmax accumulators
    li = pl.program_id(2)
    nl = pl.num_programs(2)

    @pl.when(li == 0)
    def _init():
        m_scr[...] = jnp.full_like(m_scr, -1e30)
        d_scr[...] = jnp.zeros_like(d_scr)
        y_scr[...] = jnp.zeros_like(y_scr)

    d = x_ref.shape[-1]
    bc = y_ref.shape[-1]

    # Per-tile cast keeps the x HBM stream at its original width (no extra
    # wrapper cast pass); merging (block_b, block_l) is layout-trivial since
    # block_l % 8 == 0.
    x = x_ref[...].reshape(block_b * block_l, d).astype(uwT_ref.dtype)

    # Two canonical [M, D] @ [D, C] MXU matmuls with f32 accumulation.
    scores = jnp.dot(x, uwT_ref[...], preferred_element_type=jnp.float32)
    t = jnp.dot(x, fwT_ref[...], preferred_element_type=jnp.float32)
    scores = scores.reshape(block_b, block_l, bc)
    t = t.reshape(block_b, block_l, bc)

    if need_mask:
        # Mask padded sequence positions BEFORE the max so an all-negative
        # valid row cannot be swamped by zero-padded scores.
        rem = l_valid - li * block_l
        local = lax.broadcasted_iota(jnp.int32, (1, block_l, 1), 1)
        scores = jnp.where(local < rem, scores, -1e30)

    # Online softmax update over this L tile (all f32).
    blk_max = jnp.max(scores, axis=1)                       # (bb, bc)
    m_new = jnp.maximum(m_scr[...], blk_max)
    corr = jnp.exp(m_scr[...] - m_new)
    e = jnp.exp(scores - m_new[:, None, :])                 # padded -> 0
    d_scr[...] = corr * d_scr[...] + jnp.sum(e, axis=1)
    y_scr[...] = corr * y_scr[...] + jnp.sum(e * t, axis=1)
    m_scr[...] = m_new

    @pl.when(li == nl - 1)
    def _finalize():
        inv = pl.reciprocal(d_scr[...], approx=approx_recip)
        y_ref[...] = (y_scr[...] * inv).astype(y_ref.dtype)


def output_layer(x, u_w, f_w, f_b, *, block_b=16, block_c=256, block_l=128,
                 mxu_dtype=jnp.bfloat16):
    """Pallas forward of OutputLayer.

    x   : (B, L, D)   inputs
    u_w : (C, D)      U.weight
    f_w : (C, D)      final.weight
    f_b : (C,)        final.bias
    returns (B, C) float32
    """
    B, L, D = x.shape
    C = u_w.shape[0]

    mxu_dtype = jnp.dtype(mxu_dtype)
    approx_recip = mxu_dtype != jnp.dtype(jnp.float32)

    # Clamp tiles for small problems; keep hardware-aligned granularity.
    block_b = min(block_b, _round_up(B, 8))
    block_c = min(block_c, _round_up(C, 128))
    block_l = min(block_l, _round_up(L, 8))
    assert block_b % 8 == 0 and block_l % 8 == 0 and block_c % 128 == 0

    b_pad = _round_up(B, block_b)
    l_pad = _round_up(L, block_l)
    c_pad = _round_up(C, block_c)
    nb, nc, nl = b_pad // block_b, c_pad // block_c, l_pad // block_l

    # Pad in the wrapper (original dtype for x; weights cast once, they are small).
    xp = jnp.pad(x, ((0, b_pad - B), (0, l_pad - L), (0, 0)))
    uwT = jnp.pad(u_w.T, ((0, 0), (0, c_pad - C))).astype(mxu_dtype)   # (D, Cp)
    fwT = jnp.pad(f_w.T, ((0, 0), (0, c_pad - C))).astype(mxu_dtype)   # (D, Cp)

    kernel = functools.partial(
        _output_layer_kernel, block_b=block_b, block_l=block_l, l_valid=L,
        need_mask=(l_pad != L), approx_recip=approx_recip)

    # Live VMEM per grid step (pipeline buffers + scratch + f32 intermediates).
    x_item = xp.dtype.itemsize
    w_item = mxu_dtype.itemsize
    live_bytes = (
        2 * block_b * block_l * D * x_item        # double-buffered x tile
        + 2 * 2 * D * block_c * w_item            # double-buffered weight tiles
        + 2 * block_b * block_c * 4               # double-buffered output tile
        + 3 * block_b * block_c * 4               # online-softmax scratch
        + block_b * block_l * D * w_item          # in-kernel cast copy of x
        + 3 * block_b * block_l * block_c * 4     # scores / t / e (f32)
        + 8 * block_b * block_c * 4)              # small f32 temporaries
    try:
        vmem_cap = int(pltpu.get_tpu_info().vmem_capacity_bytes)
    except Exception:
        vmem_cap = 64 * 2**20                     # conservative fallback
    vmem_cap -= 16 * 2**20                        # headroom for compiler scratch
    vmem_limit = int(max(32 * 2**20, min(vmem_cap, int(live_bytes * 1.5))))

    cost = pl.CostEstimate(
        flops=4 * b_pad * l_pad * D * c_pad,
        transcendentals=b_pad * l_pad * c_pad,
        bytes_accessed=(nc * b_pad * l_pad * D * x_item
                        + nb * 2 * D * c_pad * w_item
                        + b_pad * c_pad * 4))

    y = pl.pallas_call(
        kernel,
        out_shape=jax.ShapeDtypeStruct((b_pad, c_pad), jnp.float32),
        grid_spec=pltpu.PrefetchScalarGridSpec(
            num_scalar_prefetch=0,
            grid=(nb, nc, nl),                     # batch outermost -> megacore shards batch
            in_specs=[
                pl.BlockSpec((block_b, block_l, D), lambda b, c, l: (b, l, 0)),
                pl.BlockSpec((D, block_c), lambda b, c, l: (0, c)),
                pl.BlockSpec((D, block_c), lambda b, c, l: (0, c)),
            ],
            out_specs=pl.BlockSpec((block_b, block_c), lambda b, c, l: (b, c)),
            scratch_shapes=[
                pltpu.VMEM((block_b, block_c), jnp.float32),   # running max
                pltpu.VMEM((block_b, block_c), jnp.float32),   # running denom
                pltpu.VMEM((block_b, block_c), jnp.float32),   # running y_un
            ]),
        compiler_params=pltpu.CompilerParams(
            dimension_semantics=("parallel", "parallel", "arbitrary"),
            vmem_limit_bytes=vmem_limit),
        cost_estimate=cost,
    )(xp, uwT, fwT)

    # Bias add + un-padding outside the kernel (keeps the kernel store path
    # lane-dense, no resident bias block).
    return y[:B, :C] + f_b.astype(jnp.float32)[None, :]


def reference(x, u_w, f_w, f_b):
    scores = jnp.einsum('cd,bld->bcl', u_w, x,
                        precision=jax.lax.Precision.HIGHEST)
    alpha = jax.nn.softmax(scores, axis=2)
    m = jnp.einsum('bcl,bld->bcd', alpha, x,
                   precision=jax.lax.Precision.HIGHEST)
    return jnp.sum(f_w[None] * m, axis=2) + f_b


if __name__ == "__main__":
    B, L, D, C = 2, 8, 32, 4   # batch, seq_len, input_size, num_classes

    key = jax.random.PRNGKey(0)
    kx, ku, kf, kb = jax.random.split(key, 4)

    x = jax.random.normal(kx, (B, L, D), dtype=jnp.float32)

    # Deterministic xavier-uniform init for both weight matrices (shape (C, D)).
    bound = (6.0 / (D + C)) ** 0.5
    u_w = jax.random.uniform(ku, (C, D), jnp.float32, -bound, bound)
    f_w = jax.random.uniform(kf, (C, D), jnp.float32, -bound, bound)
    # nn.Linear bias init: uniform(-1/sqrt(fan_in), 1/sqrt(fan_in))
    bb = 1.0 / (D ** 0.5)
    f_b = jax.random.uniform(kb, (C,), jnp.float32, -bb, bb)

    y_ref = reference(x, u_w, f_w, f_b)

    # Default (performance) path: bf16 MXU operands, f32 accumulation/softmax.
    y_bf16 = output_layer(x, u_w, f_w, f_b)
    jax.block_until_ready(y_bf16)
    assert y_bf16.shape == (B, C)
    assert jnp.allclose(y_bf16, y_ref, atol=1e-1, rtol=1e-1), (y_bf16, y_ref)

    # f32 MXU path (tighter numerics, same kernel structure).
    y_f32 = output_layer(x, u_w, f_w, f_b, mxu_dtype=jnp.float32)
    jax.block_until_ready(y_f32)
    assert y_f32.shape == (B, C)
    assert jnp.allclose(y_f32, y_ref, atol=5e-2, rtol=5e-2), (y_f32, y_ref)

    # Exercise the L-tiled online-softmax path: multiple "arbitrary" grid steps
    # plus a partially padded (masked) last L block.
    L2 = 20
    x2 = jax.random.normal(kx, (B, L2, D), dtype=jnp.float32)
    y2_ref = reference(x2, u_w, f_w, f_b)
    y2 = output_layer(x2, u_w, f_w, f_b, mxu_dtype=jnp.float32, block_l=8)
    jax.block_until_ready(y2)
    assert y2.shape == (B, C)
    assert jnp.allclose(y2, y2_ref, atol=5e-2, rtol=5e-2), (y2, y2_ref)

    print("KERNEL_OK")
</pallas_src>

<mosaic_0001>
module attributes {stable_mosaic.version = 11 : i64} {
  func.func @_output_layer_kernel(%arg0: i32, %arg1: i32, %arg2: i32, %arg3: memref<8x8x32xf32, #tpu.memory_space<vmem>>, %arg4: memref<32x128xbf16, #tpu.memory_space<vmem>>, %arg5: memref<32x128xbf16, #tpu.memory_space<vmem>>, %arg6: memref<8x128xf32, #tpu.memory_space<vmem>>, %arg7: memref<8x128xf32, #tpu.memory_space<vmem>>, %arg8: memref<8x128xf32, #tpu.memory_space<vmem>>, %arg9: memref<8x128xf32, #tpu.memory_space<vmem>>) attributes {dimension_semantics = [#tpu.dimension_semantics<parallel>, #tpu.dimension_semantics<parallel>, #tpu.dimension_semantics<arbitrary>], iteration_bounds = array<i64: 1, 1, 1>, scalar_prefetch = 0 : i64, scratch_operands = 3 : i64, tpu.core_type = #tpu.core_type<tc>, window_params = [{transform_indices = @transform_0, window_bounds = array<i64: 8, 8, 32>}, {transform_indices = @transform_1, window_bounds = array<i64: 32, 128>}, {transform_indices = @transform_2, window_bounds = array<i64: 32, 128>}, {transform_indices = @transform_3, window_bounds = array<i64: 8, 128>}]} {
    %c0_i32 = arith.constant 0 : i32
    %0 = arith.cmpi eq, %arg2, %c0_i32 : i32
    %1 = arith.extui %0 : i1 to i32
    %c0_i32_0 = arith.constant 0 : i32
    %2 = arith.cmpi ne, %1, %c0_i32_0 : i32
    scf.if %2 {
      %cst_27 = arith.constant -1.000000e+30 : f32
      %37 = vector.broadcast %cst_27 : f32 to vector<8x128xf32>
      %c0_28 = arith.constant 0 : index
      %c0_29 = arith.constant 0 : index
      %38 = vector.load %arg7[%c0_28, %c0_29] : memref<8x128xf32, #tpu.memory_space<vmem>>, vector<8x128xf32>
      tpu.vector_store %arg7[%c0_28, %c0_29], %37 {strides = array<i32>} : memref<8x128xf32, #tpu.memory_space<vmem>>, vector<8x128xf32>,
      %cst_30 = arith.constant 0.000000e+00 : f32
      %39 = vector.broadcast %cst_30 : f32 to vector<8x128xf32>
      %c0_31 = arith.constant 0 : index
      %c0_32 = arith.constant 0 : index
      %40 = vector.load %arg8[%c0_31, %c0_32] : memref<8x128xf32, #tpu.memory_space<vmem>>, vector<8x128xf32>
      tpu.vector_store %arg8[%c0_31, %c0_32], %39 {strides = array<i32>} : memref<8x128xf32, #tpu.memory_space<vmem>>, vector<8x128xf32>,
      %cst_33 = arith.constant 0.000000e+00 : f32
      %41 = vector.broadcast %cst_33 : f32 to vector<8x128xf32>
      %c0_34 = arith.constant 0 : index
      %c0_35 = arith.constant 0 : index
      %42 = vector.load %arg9[%c0_34, %c0_35] : memref<8x128xf32, #tpu.memory_space<vmem>>, vector<8x128xf32>
      tpu.vector_store %arg9[%c0_34, %c0_35], %41 {strides = array<i32>} : memref<8x128xf32, #tpu.memory_space<vmem>>, vector<8x128xf32>,
    } else {
    }
    %c0 = arith.constant 0 : index
    %c0_1 = arith.constant 0 : index
    %c0_2 = arith.constant 0 : index
    %3 = vector.load %arg3[%c0, %c0_1, %c0_2] : memref<8x8x32xf32, #tpu.memory_space<vmem>>, vector<8x8x32xf32>
    %4 = vector.shape_cast %3 : vector<8x8x32xf32> to vector<64x32xf32>
    %5 = arith.truncf %4 : vector<64x32xf32> to vector<64x32xbf16>
    %c0_3 = arith.constant 0 : index
    %c0_4 = arith.constant 0 : index
    %6 = vector.load %arg4[%c0_3, %c0_4] : memref<32x128xbf16, #tpu.memory_space<vmem>>, vector<32x128xbf16>
    %cst = arith.constant dense<0.000000e+00> : vector<64x128xf32>
    %7 = tpu.matmul %5, %6, %cst {dimension_numbers = #tpu.dot_dimension_numbers<[1], [0], [0], [1], [0, 0, 1, 1], [], []>} : vector<64x32xbf16>, vector<32x128xbf16>, vector<64x128xf32> -> vector<64x128xf32>
    %c0_5 = arith.constant 0 : index
    %c0_6 = arith.constant 0 : index
    %8 = vector.load %arg5[%c0_5, %c0_6] : memref<32x128xbf16, #tpu.memory_space<vmem>>, vector<32x128xbf16>
    %cst_7 = arith.constant dense<0.000000e+00> : vector<64x128xf32>
    %9 = tpu.matmul %5, %8, %cst_7 {dimension_numbers = #tpu.dot_dimension_numbers<[1], [0], [0], [1], [0, 0, 1, 1], [], []>} : vector<64x32xbf16>, vector<32x128xbf16>, vector<64x128xf32> -> vector<64x128xf32>
    %10 = vector.shape_cast %7 : vector<64x128xf32> to vector<8x8x128xf32>
    %11 = vector.shape_cast %9 : vector<64x128xf32> to vector<8x8x128xf32>
    %cst_8 = arith.constant dense<0xFF800000> : vector<8x128xf32>
    %12 = vector.multi_reduction <maximumf>, %10, %cst_8 [1] : vector<8x8x128xf32> to vector<8x128xf32>
    %c0_9 = arith.constant 0 : index
    %c0_10 = arith.constant 0 : index
    %13 = vector.load %arg7[%c0_9, %c0_10] : memref<8x128xf32, #tpu.memory_space<vmem>>, vector<8x128xf32>
    %14 = arith.maximumf %13, %12 : vector<8x128xf32>
    %c0_11 = arith.constant 0 : index
    %c0_12 = arith.constant 0 : index
    %15 = vector.load %arg7[%c0_11, %c0_12] : memref<8x128xf32, #tpu.memory_space<vmem>>, vector<8x128xf32>
    %16 = arith.subf %15, %14 : vector<8x128xf32>
    %17 = math.exp %16 : vector<8x128xf32>
    %18 = vector.shape_cast %14 : vector<8x128xf32> to vector<8x1x128xf32>
    %19 = vector.broadcast %18 : vector<8x1x128xf32> to vector<8x8x128xf32>
    %20 = arith.subf %10, %19 : vector<8x8x128xf32>
    %21 = math.exp %20 : vector<8x8x128xf32>
    %c0_13 = arith.constant 0 : index
    %c0_14 = arith.constant 0 : index
    %22 = vector.load %arg8[%c0_13, %c0_14] : memref<8x128xf32, #tpu.memory_space<vmem>>, vector<8x128xf32>
    %23 = arith.mulf %17, %22 : vector<8x128xf32>
    %cst_15 = arith.constant dense<0.000000e+00> : vector<8x128xf32>
    %24 = vector.multi_reduction <add>, %21, %cst_15 [1] : vector<8x8x128xf32> to vector<8x128xf32>
    %25 = arith.addf %23, %24 : vector<8x128xf32>
    %c0_16 = arith.constant 0 : index
    %c0_17 = arith.constant 0 : index
    %26 = vector.load %arg8[%c0_16, %c0_17] : memref<8x128xf32, #tpu.memory_space<vmem>>, vector<8x128xf32>
    tpu.vector_store %arg8[%c0_16, %c0_17], %25 {strides = array<i32>} : memref<8x128xf32, #tpu.memory_space<vmem>>, vector<8x128xf32>,
    %c0_18 = arith.constant 0 : index
    %c0_19 = arith.constant 0 : index
    %27 = vector.load %arg9[%c0_18, %c0_19] : memref<8x128xf32, #tpu.memory_space<vmem>>, vector<8x128xf32>
    %28 = arith.mulf %17, %27 : vector<8x128xf32>
    %29 = arith.mulf %21, %11 : vector<8x8x128xf32>
    %cst_20 = arith.constant dense<0.000000e+00> : vector<8x128xf32>
    %30 = vector.multi_reduction <add>, %29, %cst_20 [1] : vector<8x8x128xf32> to vector<8x128xf32>
    %31 = arith.addf %28, %30 : vector<8x128xf32>
    %c0_21 = arith.constant 0 : index
    %c0_22 = arith.constant 0 : index
    %32 = vector.load %arg9[%c0_21, %c0_22] : memref<8x128xf32, #tpu.memory_space<vmem>>, vector<8x128xf32>
    tpu.vector_store %arg9[%c0_21, %c0_22], %31 {strides = array<i32>} : memref<8x128xf32, #tpu.memory_space<vmem>>, vector<8x128xf32>,
    %c0_23 = arith.constant 0 : index
    %c0_24 = arith.constant 0 : index
    %33 = vector.load %arg7[%c0_23, %c0_24] : memref<8x128xf32, #tpu.memory_space<vmem>>, vector<8x128xf32>
    tpu.vector_store %arg7[%c0_23, %c0_24], %14 {strides = array<i32>} : memref<8x128xf32, #tpu.memory_space<vmem>>, vector<8x128xf32>,
    %c0_i32_25 = arith.constant 0 : i32
    %34 = arith.cmpi eq, %arg2, %c0_i32_25 : i32
    %35 = arith.extui %34 : i1 to i32
    %c0_i32_26 = arith.constant 0 : i32
    %36 = arith.cmpi ne, %35, %c0_i32_26 : i32
    scf.if %36 {
      %c0_27 = arith.constant 0 : index
      %c0_28 = arith.constant 0 : index
      %37 = vector.load %arg8[%c0_27, %c0_28] : memref<8x128xf32, #tpu.memory_space<vmem>>, vector<8x128xf32>
      %38 = tpu.reciprocal %37 {approx = true} : vector<8x128xf32> -> vector<8x128xf32>
      %c0_29 = arith.constant 0 : index
      %c0_30 = arith.constant 0 : index
      %39 = vector.load %arg9[%c0_29, %c0_30] : memref<8x128xf32, #tpu.memory_space<vmem>>, vector<8x128xf32>
      %40 = arith.mulf %39, %38 : vector<8x128xf32>
      %c0_31 = arith.constant 0 : index
      %c0_32 = arith.constant 0 : index
      %41 = vector.load %arg6[%c0_31, %c0_32] : memref<8x128xf32, #tpu.memory_space<vmem>>, vector<8x128xf32>
      tpu.vector_store %arg6[%c0_31, %c0_32], %40 {strides = array<i32>} : memref<8x128xf32, #tpu.memory_space<vmem>>, vector<8x128xf32>,
    } else {
    }
    return
  }
  func.func @transform_0(%arg0: i32, %arg1: i32, %arg2: i32) -> (i32, i32, i32) {
    %c0_i32 = arith.constant 0 : i32
    %c0_i32_0 = arith.constant 0 : i32
    return %arg0, %arg2, %c0_i32 : i32, i32, i32
  }
  func.func @transform_1(%arg0: i32, %arg1: i32, %arg2: i32) -> (i32, i32) {
    %c0_i32 = arith.constant 0 : i32
    %c0_i32_0 = arith.constant 0 : i32
    return %c0_i32, %arg1 : i32, i32
  }
  func.func @transform_2(%arg0: i32, %arg1: i32, %arg2: i32) -> (i32, i32) {
    %c0_i32 = arith.constant 0 : i32
    %c0_i32_0 = arith.constant 0 : i32
    return %c0_i32, %arg1 : i32, i32
  }
  func.func @transform_3(%arg0: i32, %arg1: i32, %arg2: i32) -> (i32, i32) {
    %c0_i32 = arith.constant 0 : i32
    return %arg0, %arg1 : i32, i32
  }
}

</mosaic_0001>

<llo_original>
// kernel: tpu_custom_call.1
$region0: #{tpu_custom_call.1}
  #allocation0 [shape = 'u32[]', space=smem, size = 0x4, offset = 0x4, fixed_abs, tag = 'smem constant byte address 0x4 - core index']
  #allocation1 [shape = 'u32[144,128]{1,0:T(1,128)}', space=vmem, size = 0x12000, scoped, tag = 'internal scratch']
  #allocation2 [shape = 'f32[8,128]{1,0:T(8,128)}', space=vmem, size = 0x1000, scoped, tag = 'scratch operand']
  #allocation3 [shape = 'f32[8,128]{1,0:T(8,128)}', space=vmem, size = 0x1000, scoped, tag = 'scratch operand']
  #allocation4 [shape = 'f32[8,128]{1,0:T(8,128)}', space=vmem, size = 0x1000, scoped, tag = 'scratch operand']
  %s0 = inlined_call_operand.hbm [shape: f32[8,8,32], index: 0, kind: input, shape index: {}]
  %s1 = inlined_call_operand.hbm [shape: bf16[32,128], index: 1, kind: input, shape index: {}]
  %s2 = inlined_call_operand.hbm [shape: bf16[32,128], index: 2, kind: input, shape index: {}]
  %s3 = inlined_call_operand.hbm [shape: f32[8,128], index: 3, kind: output, shape index: {}]
  %s4 = sld [smem:[#allocation0]]
  $region42: #{tpu_custom_call.1} parent=0
    _
  %s6 = ssub.s32 1, %s4
  %s7 = scalar_select 0, %s6, %s4
  $region1: #{tpu_custom_call.1} parent=0
    #allocation5 [shape = 'u8[32768]{0}', space=vmem, size = 0x8000, scoped, tag = 'input window, operand 0, single buffered']
    #allocation6 [shape = 's32[1]{0}', space=sflag, size = 0x4, scoped, tag = 'scoped memory for tpu_custom_call.1']
    #allocation7 [shape = 's32[1]{0}', space=sflag, size = 0x4, scoped, tag = 'scoped memory for tpu_custom_call.1']
    #allocation8 [shape = 'u8[8192]{0}', space=vmem, size = 0x2000, scoped, tag = 'input window, operand 1, single buffered']
    #allocation9 [shape = 's32[1]{0}', space=sflag, size = 0x4, scoped, tag = 'scoped memory for tpu_custom_call.1']
    #allocation10 [shape = 'u8[8192]{0}', space=vmem, size = 0x2000, scoped, tag = 'input window, operand 2, single buffered']
    #allocation11 [shape = 'u8[4096]{0}', space=vmem, size = 0x1000, scoped, tag = 'output window, operand 0, single buffered']
    %8 = vsyncpa [#allocation6], 0
    %9 = vsyncpa [#allocation9], 0
    %10 = vsyncpa [#allocation7], 0
    // Predicated region
    $region2: #{tpu_custom_call.1} parent=1 // pred_check
      _
    $region3: #{tpu_custom_call.1} parent=1 // pred_check_branch
      %12 = sbr.rel (0) target = $region5
    $region4: #{tpu_custom_call.1} parent=1 // pred_region
      %s14 = ssub.s32 1024, 1024
      %15 = vsyncadd [#allocation6], %s14
      %s16 = sshll.u32 [#allocation5], 4
      %s17 = int_to_ptr.vmem [resolvable:$true] %s16
      %22 = dma.hbm_to_vmem [thread:$0]  %s0, 1024, %s17, [#allocation6], 128, 128, 8
    $region5: #{tpu_custom_call.1} parent=1 // pred_fallthru
      _
    // Predicated region
    $region6: #{tpu_custom_call.1} parent=1 // pred_check
      _
    $region7: #{tpu_custom_call.1} parent=1 // pred_check_branch
      %24 = sbr.rel (0) target = $region9
    $region8: #{tpu_custom_call.1} parent=1 // pred_region
      %s26 = ssub.s32 256, 256
      %27 = vsyncadd [#allocation9], %s26
      %s28 = sshll.u32 [#allocation8], 4
      %s29 = int_to_ptr.vmem [resolvable:$true] %s28
      %34 = dma.hbm_to_vmem [thread:$0]  %s1, 256, %s29, [#allocation9], 64, 64, 4
    $region9: #{tpu_custom_call.1} parent=1 // pred_fallthru
      _
    // Predicated region
    $region10: #{tpu_custom_call.1} parent=1 // pred_check
      _
    $region11: #{tpu_custom_call.1} parent=1 // pred_check_branch
      %36 = sbr.rel (0) target = $region13
    $region12: #{tpu_custom_call.1} parent=1 // pred_region
      %s38 = ssub.s32 256, 256
      %39 = vsyncadd [#allocation9], %s38
      %s40 = sshll.u32 [#allocation10], 4
      %s41 = int_to_ptr.vmem [resolvable:$true] %s40
      %46 = dma.hbm_to_vmem [thread:$0]  %s2, 256, %s41, [#allocation9], 64, 64, 4
    $region13: #{tpu_custom_call.1} parent=1 // pred_fallthru
      _
    // Predicated region
    $region14: #{tpu_custom_call.1} parent=1 // pred_check
      _
    $region15: #{tpu_custom_call.1} parent=1 // pred_check_branch
      %48 = sbr.rel (0) target = $region17
    $region16: #{tpu_custom_call.1} parent=1 // pred_region
      %49 = dma.done [#allocation6], 1024
    $region17: #{tpu_custom_call.1} parent=1 // pred_fallthru
      _
    // Predicated region
    $region18: #{tpu_custom_call.1} parent=1 // pred_check
      _
    $region19: #{tpu_custom_call.1} parent=1 // pred_check_branch
      %51 = sbr.rel (0) target = $region21
    $region20: #{tpu_custom_call.1} parent=1 // pred_region
      %52 = dma.done [#allocation9], 256
    $region21: #{tpu_custom_call.1} parent=1 // pred_fallthru
      _
    // Predicated region
    $region22: #{tpu_custom_call.1} parent=1 // pred_check
      _
    $region23: #{tpu_custom_call.1} parent=1 // pred_check_branch
      %54 = sbr.rel (0) target = $region25
    $region24: #{tpu_custom_call.1} parent=1 // pred_region
      %55 = dma.done [#allocation9], 256
    $region25: #{tpu_custom_call.1} parent=1 // pred_fallthru
      _
    %p57 = scmp.eq.s32.totalorder 0, 0
    // Predicated region
    $region26: #{tpu_custom_call.1} parent=1 // pred_check
      %p58 = pneg %p57
    $region27: #{tpu_custom_call.1} parent=1 // pred_check_branch
      %60 = sbr.rel (%p58) target = $region29
    $region28: #{tpu_custom_call.1} parent=1 // pred_region
      %61 = vst [vmem:[#allocation2] sm:$0xff] -1e+30
      %62 = vst [vmem:[#allocation3] sm:$0xff] 0.0
      %63 = vst [vmem:[#allocation4] sm:$0xff] 0.0
    $region29: #{tpu_custom_call.1} parent=1 // pred_fallthru
      _
    %v64 = vld [vmem:[#allocation5] sm:$0xff]
    %v65 = vld [vmem:[#allocation5 + $0x8] sm:$0xff]
    %v66 = vld [vmem:[#allocation5 + $0x10] sm:$0xff]
    %v67 = vld [vmem:[#allocation5 + $0x18] sm:$0xff]
    %v68 = vld [vmem:[#allocation5 + $0x20] sm:$0xff]
    %v69 = vld [vmem:[#allocation5 + $0x28] sm:$0xff]
    %v70 = vld [vmem:[#allocation5 + $0x30] sm:$0xff]
    %v71 = vld [vmem:[#allocation5 + $0x38] sm:$0xff]
    %v72 = vpack.c.bf16 %v65, %v64
    %v73 = vpack.c.bf16 %v67, %v66
    %v74 = vpack.c.bf16 %v69, %v68
    %v75 = vpack.c.bf16 %v71, %v70
    %v76 = vld [vmem:[#allocation8] sm:$0xf]
    %v77 = vld [vmem:[#allocation8 + $0x4] sm:$0xf]
    %v78 = vld [vmem:[#allocation8 + $0x8] sm:$0xf]
    %v79 = vld [vmem:[#allocation8 + $0xc] sm:$0xf]
    %v84 = vunpack.c.l.b16 %v76
    %v85 = vunpack.c.l.b16 %v77
    %v86 = vunpack.c.l.b16 %v78
    %v87 = vunpack.c.l.b16 %v79
    %v88 = vpack.c.b16 %v85, %v84
    %v89 = vpack.c.b16 %v87, %v86
    %vm92 = vcmask 261120
    %v94 = vsel %vm92, %v72, 0
    %v97 = vsel %vm92, %v73, 0
    %v100 = vsel %vm92, %v74, 0
    %v103 = vsel %vm92, %v75, 0
    %105 = vmatprep.subr.bf16.mxu0 0
    %106 = vmatpush1.bf16.msra.mxu0 %v88
    %107 = vmatprep.subr.bf16.mxu0 0
    %108 = vmatpush1.bf16.msra.mxu0 %v89
    %109 = vmatprep.subr.bf16.mxu0 0
    %110 = vmatpush1.bf16.msra.mxu0 0
    %111 = vmatprep.subr.bf16.mxu0 0
    %112 = vmatpush1.bf16.msra.mxu0 0
    %113 = vmatprep.subr.bf16.mxu0 0
    %114 = vmatpush1.bf16.msra.mxu0 0
    %115 = vmatprep.subr.bf16.mxu0 0
    %116 = vmatpush1.bf16.msra.mxu0 0
    %117 = vmatprep.subr.bf16.mxu0 0
    %118 = vmatpush1.bf16.msra.mxu0 0
    %119 = vmatprep.subr.bf16.mxu0 0
    %120 = vmatpush1.bf16.msra.mxu0 0
    %121 = vmatprep.subr.bf16.mxu0 0
    %122 = vmatpush1.bf16.msra.mxu0 0
    %123 = vmatprep.subr.bf16.mxu0 0
    %124 = vmatpush1.bf16.msra.mxu0 0
    %125 = vmatprep.subr.bf16.mxu0 0
    %126 = vmatpush1.bf16.msra.mxu0 0
    %127 = vmatprep.subr.bf16.mxu0 0
    %128 = vmatpush1.bf16.msra.mxu0 0
    %129 = vmatprep.subr.bf16.mxu0 0
    %130 = vmatpush1.bf16.msra.mxu0 0
    %131 = vmatprep.subr.bf16.mxu0 0
    %132 = vmatpush1.bf16.msra.mxu0 0
    %133 = vmatprep.subr.bf16.mxu0 0
    %134 = vmatpush1.bf16.msra.mxu0 0
    %135 = vmatprep.subr.bf16.mxu0 0
    %136 = vmatpush1.bf16.msra.mxu0 0
    %137 = vmatprep.mubr.bf16.mxu0 0
    %138 = vmatmul.mubr.bf16.gmra.mrb[0].mxu0 %v94
    %v139 = vpop.f32.mrb[0].mxu0
    %v140 = vadd.f32 0.0, %v139
    %v141 = vpop.f32.mrb[0].mxu0
    %v142 = vpop.f32.mrb[0].mxu0
    %v143 = vadd.f32 0.0, %v142
    %v144 = vpop.f32.mrb[0].mxu0
    %145 = vmatprep.mubr.bf16.mxu0 0
    %146 = vmatmul.mubr.bf16.gmra.mrb[0].mxu0 %v97
    %v147 = vpop.f32.mrb[0].mxu0
    %v148 = vadd.f32 0.0, %v147
    %v149 = vpop.f32.mrb[0].mxu0
    %v150 = vpop.f32.mrb[0].mxu0
    %v151 = vadd.f32 0.0, %v150
    %v152 = vpop.f32.mrb[0].mxu0
    %153 = vmatprep.mubr.bf16.mxu0 0
    %154 = vmatmul.mubr.bf16.gmra.mrb[0].mxu0 %v100
    %v155 = vpop.f32.mrb[0].mxu0
    %v156 = vadd.f32 0.0, %v155
    %v157 = vpop.f32.mrb[0].mxu0
    %v158 = vpop.f32.mrb[0].mxu0
    %v159 = vadd.f32 0.0, %v158
    %v160 = vpop.f32.mrb[0].mxu0
    %161 = vmatprep.mubr.bf16.mxu0 0
    %162 = vmatmul.mubr.bf16.gmra.mrb[0].mxu0 %v103
    %v163 = vpop.f32.mrb[0].mxu0
    %v164 = vadd.f32 0.0, %v163
    %v165 = vpop.f32.mrb[0].mxu0
    %v166 = vpop.f32.mrb[0].mxu0
    %v167 = vadd.f32 0.0, %v166
    %v168 = vpop.f32.mrb[0].mxu0
    %169 = vdwg.mxu0
    %v170 = vld [vmem:[#allocation10] sm:$0xf]
    %v171 = vld [vmem:[#allocation10 + $0x4] sm:$0xf]
    %v172 = vld [vmem:[#allocation10 + $0x8] sm:$0xf]
    %v173 = vld [vmem:[#allocation10 + $0xc] sm:$0xf]
    %v178 = vunpack.c.l.b16 %v170
    %v179 = vunpack.c.l.b16 %v171
    %v180 = vunpack.c.l.b16 %v172
    %v181 = vunpack.c.l.b16 %v173
    %v182 = vpack.c.b16 %v179, %v178
    %v183 = vpack.c.b16 %v181, %v180
    %186 = vmatprep.subr.bf16.mxu0 0
    %187 = vmatpush1.bf16.msra.mxu0 %v182
    %188 = vmatprep.subr.bf16.mxu0 0
    %189 = vmatpush1.bf16.msra.mxu0 %v183
    %190 = vmatprep.subr.bf16.mxu0 0
    %191 = vmatpush1.bf16.msra.mxu0 0
    %192 = vmatprep.subr.bf16.mxu0 0
    %193 = vmatpush1.bf16.msra.mxu0 0
    %194 = vmatprep.subr.bf16.mxu0 0
    %195 = vmatpush1.bf16.msra.mxu0 0
    %196 = vmatprep.subr.bf16.mxu0 0
    %197 = vmatpush1.bf16.msra.mxu0 0
    %198 = vmatprep.subr.bf16.mxu0 0
    %199 = vmatpush1.bf16.msra.mxu0 0
    %200 = vmatprep.subr.bf16.mxu0 0
    %201 = vmatpush1.bf16.msra.mxu0 0
    %202 = vmatprep.subr.bf16.mxu0 0
    %203 = vmatpush1.bf16.msra.mxu0 0
    %204 = vmatprep.subr.bf16.mxu0 0
    %205 = vmatpush1.bf16.msra.mxu0 0
    %206 = vmatprep.subr.bf16.mxu0 0
    %207 = vmatpush1.bf16.msra.mxu0 0
    %208 = vmatprep.subr.bf16.mxu0 0
    %209 = vmatpush1.bf16.msra.mxu0 0
    %210 = vmatprep.subr.bf16.mxu0 0
    %211 = vmatpush1.bf16.msra.mxu0 0
    %212 = vmatprep.subr.bf16.mxu0 0
    %213 = vmatpush1.bf16.msra.mxu0 0
    %214 = vmatprep.subr.bf16.mxu0 0
    %215 = vmatpush1.bf16.msra.mxu0 0
    %216 = vmatprep.subr.bf16.mxu0 0
    %217 = vmatpush1.bf16.msra.mxu0 0
    %218 = vmatprep.mubr.bf16.mxu0 0
    %219 = vmatmul.mubr.bf16.gmra.mrb[0].mxu0 %v94
    %v220 = vpop.f32.mrb[0].mxu0
    %v221 = vadd.f32 0.0, %v220
    %v222 = vpop.f32.mrb[0].mxu0
    %v223 = vpop.f32.mrb[0].mxu0
    %v224 = vadd.f32 0.0, %v223
    %v225 = vpop.f32.mrb[0].mxu0
    %226 = vmatprep.mubr.bf16.mxu0 0
    %227 = vmatmul.mubr.bf16.gmra.mrb[0].mxu0 %v97
    %v228 = vpop.f32.mrb[0].mxu0
    %v229 = vadd.f32 0.0, %v228
    %v230 = vpop.f32.mrb[0].mxu0
    %v231 = vpop.f32.mrb[0].mxu0
    %v232 = vadd.f32 0.0, %v231
    %v233 = vpop.f32.mrb[0].mxu0
    %234 = vmatprep.mubr.bf16.mxu0 0
    %235 = vmatmul.mubr.bf16.gmra.mrb[0].mxu0 %v100
    %v236 = vpop.f32.mrb[0].mxu0
    %v237 = vadd.f32 0.0, %v236
    %v238 = vpop.f32.mrb[0].mxu0
    %v239 = vpop.f32.mrb[0].mxu0
    %v240 = vadd.f32 0.0, %v239
    %v241 = vpop.f32.mrb[0].mxu0
    %242 = vmatprep.mubr.bf16.mxu0 0
    %243 = vmatmul.mubr.bf16.gmra.mrb[0].mxu0 %v103
    %v244 = vpop.f32.mrb[0].mxu0
    %v245 = vadd.f32 0.0, %v244
    %v246 = vpop.f32.mrb[0].mxu0
    %v247 = vpop.f32.mrb[0].mxu0
    %v248 = vadd.f32 0.0, %v247
    %v249 = vpop.f32.mrb[0].mxu0
    %250 = vdwg.mxu0
    %v251 = vrot.slane %v140, 4
    %v252 = vmax.f32 %v140, %v251
    %v253 = vrot.slane %v252, 2
    %v254 = vmax.f32 %v252, %v253
    %v255 = vrot.slane %v254, 1
    %v256 = vmax.f32 %v254, %v255
    %v257 = vrot.slane %v143, 4
    %v258 = vmax.f32 %v143, %v257
    %v259 = vrot.slane %v258, 2
    %v260 = vmax.f32 %v258, %v259
    %v261 = vrot.slane %v260, 1
    %v262 = vmax.f32 %v260, %v261
    %v263 = vrot.slane %v148, 4
    %v264 = vmax.f32 %v148, %v263
    %v265 = vrot.slane %v264, 2
    %v266 = vmax.f32 %v264, %v265
    %v267 = vrot.slane %v266, 1
    %v268 = vmax.f32 %v266, %v267
    %v269 = vrot.slane %v151, 4
    %v270 = vmax.f32 %v151, %v269
    %v271 = vrot.slane %v270, 2
    %v272 = vmax.f32 %v270, %v271
    %v273 = vrot.slane %v272, 1
    %v274 = vmax.f32 %v272, %v273
    %v275 = vrot.slane %v156, 4
    %v276 = vmax.f32 %v156, %v275
    %v277 = vrot.slane %v276, 2
    %v278 = vmax.f32 %v276, %v277
    %v279 = vrot.slane %v278, 1
    %v280 = vmax.f32 %v278, %v279
    %v281 = vrot.slane %v159, 4
    %v282 = vmax.f32 %v159, %v281
    %v283 = vrot.slane %v282, 2
    %v284 = vmax.f32 %v282, %v283
    %v285 = vrot.slane %v284, 1
    %v286 = vmax.f32 %v284, %v285
    %v287 = vrot.slane %v164, 4
    %v288 = vmax.f32 %v164, %v287
    %v289 = vrot.slane %v288, 2
    %v290 = vmax.f32 %v288, %v289
    %v291 = vrot.slane %v290, 1
    %v292 = vmax.f32 %v290, %v291
    %v293 = vrot.slane %v167, 4
    %v294 = vmax.f32 %v167, %v293
    %v295 = vrot.slane %v294, 2
    %v296 = vmax.f32 %v294, %v295
    %v297 = vrot.slane %v296, 1
    %v298 = vmax.f32 %v296, %v297
    %v299 = vld [vmem:[#allocation2] sm:$0xff]
    %vm308 = vcmask 1041409
    %v309 = vsel %vm308, %v262, %v256
    %vm310 = vcmask 1042434
    %v311 = vsel %vm310, %v268, %v309
    %vm312 = vcmask 1043459
    %v313 = vsel %vm312, %v274, %v311
    %vm314 = vcmask 1044484
    %v315 = vsel %vm314, %v280, %v313
    %vm316 = vcmask 1045509
    %v317 = vsel %vm316, %v286, %v315
    %vm318 = vcmask 1046534
    %v319 = vsel %vm318, %v292, %v317
    %vm320 = vcmask 1047559
    %v321 = vsel %vm320, %v298, %v319
    %v323 = vmax.f32 %v299, %v321
    %v324 = vsub.f32 %v299, %v323
    %v325 = vmul.f32 %v324, 1.442695
    %v326 = vpow.pop %v325
    %v328 = vcombine.high %v323, %v323
    %v330 = vunpack.c.l.s4 1966171168
    %v331 = vunpack.c.0.s8 %v330
    %v332 = vlaneseq
    %v333 = vshrl.u32 %v332, 7
    %v334 = vsub.s32 %v331, %v333
    %v335 = vrot.slane %v323, %v334
    %v337 = vunpack.c.l.s4 1966171168
    %v338 = vunpack.c.0.s8 %v337
    %v339 = vlaneseq
    %v340 = vshrl.u32 %v339, 7
    %v341 = vsub.s32 %v338, %v340
    %v342 = vrot.slane %v328, %v341
    %v343 = vcombine.high %v335, %v335
    %v344 = vcombine.high %v342, %v342
    %v346 = vunpack.c.l.s4 1966171168
    %v347 = vunpack.c.0.s8 %v346
    %v348 = vlaneseq
    %v349 = vshrl.u32 %v348, 7
    %v350 = vsub.s32 %v347, %v349
    %v351 = vrot.slane %v335, %v350
    %v353 = vunpack.c.l.s4 1966171168
    %v354 = vunpack.c.0.s8 %v353
    %v355 = vlaneseq
    %v356 = vshrl.u32 %v355, 7
    %v357 = vsub.s32 %v354, %v356
    %v358 = vrot.slane %v342, %v357
    %v360 = vunpack.c.l.s4 1966171168
    %v361 = vunpack.c.0.s8 %v360
    %v362 = vlaneseq
    %v363 = vshrl.u32 %v362, 7
    %v364 = vsub.s32 %v361, %v363
    %v365 = vrot.slane %v343, %v364
    %v367 = vunpack.c.l.s4 1966171168
    %v368 = vunpack.c.0.s8 %v367
    %v369 = vlaneseq
    %v370 = vshrl.u32 %v369, 7
    %v371 = vsub.s32 %v368, %v370
    %v372 = vrot.slane %v344, %v371
    %v373 = vcombine.high %v351, %v351
    %v374 = vcombine.high %v358, %v358
    %v375 = vcombine.high %v365, %v365
    %v376 = vcombine.high %v372, %v372
    %v377 = vlaneseq
    %v378 = vshrl.u32 %v377, 7
    %v379 = vsub.s32 0, %v378
    %v380 = vrot.slane %v351, %v379
    %v381 = vlaneseq
    %v382 = vshrl.u32 %v381, 7
    %v383 = vsub.s32 0, %v382
    %v384 = vrot.slane %v365, %v383
    %v385 = vlaneseq
    %v386 = vshrl.u32 %v385, 7
    %v387 = vsub.s32 0, %v386
    %v388 = vrot.slane %v373, %v387
    %v389 = vlaneseq
    %v390 = vshrl.u32 %v389, 7
    %v391 = vsub.s32 0, %v390
    %v392 = vrot.slane %v375, %v391
    %v393 = vlaneseq
    %v394 = vshrl.u32 %v393, 7
    %v395 = vsub.s32 0, %v394
    %v396 = vrot.slane %v358, %v395
    %v397 = vlaneseq
    %v398 = vshrl.u32 %v397, 7
    %v399 = vsub.s32 0, %v398
    %v400 = vrot.slane %v372, %v399
    %v401 = vlaneseq
    %v402 = vshrl.u32 %v401, 7
    %v403 = vsub.s32 0, %v402
    %v404 = vrot.slane %v374, %v403
    %v405 = vlaneseq
    %v406 = vshrl.u32 %v405, 7
    %v407 = vsub.s32 0, %v406
    %v408 = vrot.slane %v376, %v407
    %v417 = vsub.f32 %v140, %v380
    %v418 = vsub.f32 %v143, %v384
    %v419 = vsub.f32 %v148, %v388
    %v420 = vsub.f32 %v151, %v392
    %v421 = vsub.f32 %v156, %v396
    %v422 = vsub.f32 %v159, %v400
    %v423 = vsub.f32 %v164, %v404
    %v424 = vsub.f32 %v167, %v408
    %v425 = vmul.f32 %v417, 1.442695
    %v426 = vpow.pop %v425
    %v427 = vmul.f32 %v418, 1.442695
    %v428 = vpow.pop %v427
    %v429 = vmul.f32 %v419, 1.442695
    %v430 = vpow.pop %v429
    %v431 = vmul.f32 %v420, 1.442695
    %v432 = vpow.pop %v431
    %v433 = vmul.f32 %v421, 1.442695
    %v434 = vpow.pop %v433
    %v435 = vmul.f32 %v422, 1.442695
    %v436 = vpow.pop %v435
    %v437 = vmul.f32 %v423, 1.442695
    %v438 = vpow.pop %v437
    %v439 = vmul.f32 %v424, 1.442695
    %v440 = vpow.pop %v439
    %v441 = vld [vmem:[#allocation3] sm:$0xff]
    %v442 = vmul.f32 %v326, %v441
    %v443 = vrot.slane %v426, 4
    %v444 = vadd.f32 %v426, %v443
    %v445 = vrot.slane %v444, 2
    %v446 = vadd.f32 %v444, %v445
    %v447 = vrot.slane %v446, 1
    %v448 = vadd.f32 %v446, %v447
    %v449 = vrot.slane %v428, 4
    %v450 = vadd.f32 %v428, %v449
    %v451 = vrot.slane %v450, 2
    %v452 = vadd.f32 %v450, %v451
    %v453 = vrot.slane %v452, 1
    %v454 = vadd.f32 %v452, %v453
    %v455 = vrot.slane %v430, 4
    %v456 = vadd.f32 %v430, %v455
    %v457 = vrot.slane %v456, 2
    %v458 = vadd.f32 %v456, %v457
    %v459 = vrot.slane %v458, 1
    %v460 = vadd.f32 %v458, %v459
    %v461 = vrot.slane %v432, 4
    %v462 = vadd.f32 %v432, %v461
    %v463 = vrot.slane %v462, 2
    %v464 = vadd.f32 %v462, %v463
    %v465 = vrot.slane %v464, 1
    %v466 = vadd.f32 %v464, %v465
    %v467 = vrot.slane %v434, 4
    %v468 = vadd.f32 %v434, %v467
    %v469 = vrot.slane %v468, 2
    %v470 = vadd.f32 %v468, %v469
    %v471 = vrot.slane %v470, 1
    %v472 = vadd.f32 %v470, %v471
    %v473 = vrot.slane %v436, 4
    %v474 = vadd.f32 %v436, %v473
    %v475 = vrot.slane %v474, 2
    %v476 = vadd.f32 %v474, %v475
    %v477 = vrot.slane %v476, 1
    %v478 = vadd.f32 %v476, %v477
    %v479 = vrot.slane %v438, 4
    %v480 = vadd.f32 %v438, %v479
    %v481 = vrot.slane %v480, 2
    %v482 = vadd.f32 %v480, %v481
    %v483 = vrot.slane %v482, 1
    %v484 = vadd.f32 %v482, %v483
    %v485 = vrot.slane %v440, 4
    %v486 = vadd.f32 %v440, %v485
    %v487 = vrot.slane %v486, 2
    %v488 = vadd.f32 %v486, %v487
    %v489 = vrot.slane %v488, 1
    %v490 = vadd.f32 %v488, %v489
    %v499 = vsel %vm308, %v454, %v448
    %v500 = vsel %vm310, %v460, %v499
    %v501 = vsel %vm312, %v466, %v500
    %v502 = vsel %vm314, %v472, %v501
    %v503 = vsel %vm316, %v478, %v502
    %v504 = vsel %vm318, %v484, %v503
    %v505 = vsel %vm320, %v490, %v504
    %v507 = vadd.f32 %v442, %v505
    %508 = vst [vmem:[#allocation3] sm:$0xff] %v507
    %v509 = vld [vmem:[#allocation4] sm:$0xff]
    %v510 = vmul.f32 %v326, %v509
    %v511 = vmul.f32 %v426, %v221
    %v512 = vmul.f32 %v428, %v224
    %v513 = vmul.f32 %v430, %v229
    %v514 = vmul.f32 %v432, %v232
    %v515 = vmul.f32 %v434, %v237
    %v516 = vmul.f32 %v436, %v240
    %v517 = vmul.f32 %v438, %v245
    %v518 = vmul.f32 %v440, %v248
    %v519 = vrot.slane %v511, 4
    %v520 = vadd.f32 %v511, %v519
    %v521 = vrot.slane %v520, 2
    %v522 = vadd.f32 %v520, %v521
    %v523 = vrot.slane %v522, 1
    %v524 = vadd.f32 %v522, %v523
    %v525 = vrot.slane %v512, 4
    %v526 = vadd.f32 %v512, %v525
    %v527 = vrot.slane %v526, 2
    %v528 = vadd.f32 %v526, %v527
    %v529 = vrot.slane %v528, 1
    %v530 = vadd.f32 %v528, %v529
    %v531 = vrot.slane %v513, 4
    %v532 = vadd.f32 %v513, %v531
    %v533 = vrot.slane %v532, 2
    %v534 = vadd.f32 %v532, %v533
    %v535 = vrot.slane %v534, 1
    %v536 = vadd.f32 %v534, %v535
    %v537 = vrot.slane %v514, 4
    %v538 = vadd.f32 %v514, %v537
    %v539 = vrot.slane %v538, 2
    %v540 = vadd.f32 %v538, %v539
    %v541 = vrot.slane %v540, 1
    %v542 = vadd.f32 %v540, %v541
    %v543 = vrot.slane %v515, 4
    %v544 = vadd.f32 %v515, %v543
    %v545 = vrot.slane %v544, 2
    %v546 = vadd.f32 %v544, %v545
    %v547 = vrot.slane %v546, 1
    %v548 = vadd.f32 %v546, %v547
    %v549 = vrot.slane %v516, 4
    %v550 = vadd.f32 %v516, %v549
    %v551 = vrot.slane %v550, 2
    %v552 = vadd.f32 %v550, %v551
    %v553 = vrot.slane %v552, 1
    %v554 = vadd.f32 %v552, %v553
    %v555 = vrot.slane %v517, 4
    %v556 = vadd.f32 %v517, %v555
    %v557 = vrot.slane %v556, 2
    %v558 = vadd.f32 %v556, %v557
    %v559 = vrot.slane %v558, 1
    %v560 = vadd.f32 %v558, %v559
    %v561 = vrot.slane %v518, 4
    %v562 = vadd.f32 %v518, %v561
    %v563 = vrot.slane %v562, 2
    %v564 = vadd.f32 %v562, %v563
    %v565 = vrot.slane %v564, 1
    %v566 = vadd.f32 %v564, %v565
    %v575 = vsel %vm308, %v530, %v524
    %v576 = vsel %vm310, %v536, %v575
    %v577 = vsel %vm312, %v542, %v576
    %v578 = vsel %vm314, %v548, %v577
    %v579 = vsel %vm316, %v554, %v578
    %v580 = vsel %vm318, %v560, %v579
    %v581 = vsel %vm320, %v566, %v580
    %v583 = vadd.f32 %v510, %v581
    %584 = vst [vmem:[#allocation4] sm:$0xff] %v583
    %585 = vst [vmem:[#allocation2] sm:$0xff] %v323
    // Predicated region
    $region30: #{tpu_custom_call.1} parent=1 // pred_check
      %p586 = pneg %p57
    $region31: #{tpu_custom_call.1} parent=1 // pred_check_branch
      %588 = sbr.rel (%p586) target = $region33
    $region32: #{tpu_custom_call.1} parent=1 // pred_region
      %v589 = vld [vmem:[#allocation3] sm:$0xff]
      %v590 = vrcp.pop %v589
      %v591 = vld [vmem:[#allocation4] sm:$0xff]
      %v592 = vmul.f32 %v591, %v590
      %593 = vst [vmem:[#allocation11] sm:$0xff] %v592
    $region33: #{tpu_custom_call.1} parent=1 // pred_fallthru
      _
    // Predicated region
    $region34: #{tpu_custom_call.1} parent=1 // pred_check
      _
    $region35: #{tpu_custom_call.1} parent=1 // pred_check_branch
      %595 = sbr.rel (0) target = $region37
    $region36: #{tpu_custom_call.1} parent=1 // pred_region
      %s597 = ssub.s32 128, 128
      %598 = vsyncadd [#allocation7], %s597
      %s600 = sshll.u32 [#allocation11], 4
      %s601 = int_to_ptr.vmem [resolvable:$true] %s600
      %603 = dma.vmem_to_hbm [thread:$0]  %s601, 128, %s3, [#allocation7]
    $region37: #{tpu_custom_call.1} parent=1 // pred_fallthru
      _
    // Predicated region
    $region38: #{tpu_custom_call.1} parent=1 // pred_check
      _
    $region39: #{tpu_custom_call.1} parent=1 // pred_check_branch
      %605 = sbr.rel (0) target = $region41
    $region40: #{tpu_custom_call.1} parent=1 // pred_region
      %606 = dma.done [#allocation7], 128
    $region41: #{tpu_custom_call.1} parent=1 // pred_fallthru
      _
    %607 = vsyncpa [#allocation6], 1
    %608 = vsyncpa [#allocation9], 1
    %609 = vsyncpa [#allocation7], 1

</llo_original>
